<compile_context>
chip_gen: v5e
topology: v5e:2x2
jax: 0.10.0
libtpu: 0.0.40
codegen_flags: <defaults>
</compile_context>

<pallas_src>
import functools

import jax
import jax.numpy as jnp
from jax import lax
from jax.experimental import pallas as pl
from jax.experimental.pallas import tpu as pltpu


def _stencil_store(s, o_ref, *, width):
    """2x2 border-masked stencil of the (NB, L) channel-sum plane -> o_ref."""
    l = s.shape[-1]

    # Border masks generated in-kernel (free VPU filler in a mem-bound kernel):
    # they implement the virtual ZeroPad2d((0, 1, 0, 1)).
    idx = lax.broadcasted_iota(jnp.int32, (1, l), 1)
    col_ok = (idx % width != width - 1).astype(jnp.float32)   # w+1 in-bounds
    row_ok = (idx < l - width).astype(jnp.float32)            # h+1 in-bounds
    both_ok = col_ok * row_ok

    # Shifted 2x2 neighbours via lane rotations (XLU) + masks.
    a = s                                                           # s[h, w]
    b = pltpu.roll(s, (l - 1) % l, 1) * col_ok                      # s[h, w+1]
    c = pltpu.roll(s, (l - width) % l, 1) * row_ok                  # s[h+1, w]
    d = pltpu.roll(s, (l - width - 1) % l, 1) * both_ok             # s[h+1, w+1]

    # cvo_x = [[-1, 1], [-2, 2]],  cvo_y = [[2, 1], [-2, -1]]
    gx = (b - a) + 2.0 * (d - c)
    gy = 2.0 * (a - c) + (b - d)
    o_ref[...] = jnp.sqrt(jnp.abs(gx) + jnp.abs(gy)).astype(o_ref.dtype)


def _contrast_kernel_2d(x_ref, o_ref, *, width, channels, plane):
    # x_ref: (NB, C*L) lane-dense; channels are static, lane-aligned slices.
    s = x_ref[:, 0:plane].astype(jnp.float32)
    for k in range(1, channels):
        s = s + x_ref[:, k * plane:(k + 1) * plane].astype(jnp.float32)
    _stencil_store(s, o_ref, width=width)


def _contrast_kernel_3d(x_ref, o_ref, *, width, channels):
    # x_ref: (NB, C, L); statically-unrolled per-channel accumulation so the
    # full f32 copy of the block is never materialized.
    s = x_ref[:, 0, :].astype(jnp.float32)
    for k in range(1, channels):
        s = s + x_ref[:, k, :].astype(jnp.float32)
    _stencil_store(s, o_ref, width=width)


def _vmem_capacity_bytes():
    # Generation-aware VMEM budget (v5e/v6e: 128 MiB, v7x: 64 MiB per core).
    try:
        return int(pltpu.get_tpu_info().vmem_capacity_bytes)
    except Exception:
        return 64 * 1024 * 1024


def _lane_pad(v):
    return pl.cdiv(v, 128) * 128


def _pick_batch_block(n, c, l, itemsize, vmem_bytes, use_2d):
    """Pick the batch block size with honest per-step VMEM accounting."""
    if use_2d:
        in_per_b = _lane_pad(c * l) * itemsize
    else:
        # (nb, C, L): C sits on sublanes and pads to the dtype sublane multiple
        # (8 for 32-bit, 16 for 16-bit, 32 for 8-bit).
        sub_mult = 8 * max(1, 4 // itemsize)
        in_per_b = pl.cdiv(c, sub_mult) * sub_mult * _lane_pad(l) * itemsize
    out_per_b = _lane_pad(l) * itemsize
    work_per_b = 8 * _lane_pad(l) * 4          # f32 temps: s, b, c, d, gx, gy, masks
    per_b = 2 * (in_per_b + out_per_b) + work_per_b   # double-buffered in/out

    budget = max(vmem_bytes // 3, 4 << 20)
    nb_fit = max(1, budget // per_b)
    # Aim for >= ~8 grid steps (pipelining + v7x 2-TC megacore sharding) while
    # keeping each step >= ~1 MiB of input so the ~0.35us/step pipeline
    # overhead stays amortized (v5e is strictly bandwidth-bound).
    nb_steps = pl.cdiv(n, 8)
    nb_min = max(1, min(n, pl.cdiv(1 << 20, in_per_b)))
    nb = int(min(nb_fit, max(nb_steps, nb_min), n))
    return max(nb, 1), per_b


def contrast_forward(x, out_channels, *, return_plane=False):
    """x: (N, C, H, W) -> (N, out_channels, H, W), matching Contrast.forward.

    All output channels are identical; pass return_plane=True to get the
    (N, 1, H, W) plane and skip the OC-fold HBM write when the consumer
    broadcasts anyway.
    """
    n, c, h, w = x.shape
    l = h * w
    itemsize = jnp.dtype(x.dtype).itemsize

    # Prefer channels as aligned lane slices (no 8/C sublane padding on the
    # DMA) when the per-channel plane is lane aligned.
    use_2d = (l % 128 == 0)
    # NOTE: this reshape collapses trailing row-major-contiguous dims and is
    # expected to be a layout bitcast.
    # TODO(synk): if the producer hands over a tiled 4D layout where this turns
    # into a relayout copy, take the 4D array directly / negotiate the layout.
    x_in = x.reshape(n, c * l) if use_2d else x.reshape(n, c, l)

    vmem_bytes = _vmem_capacity_bytes()
    nb, per_b = _pick_batch_block(n, c, l, itemsize, vmem_bytes, use_2d)
    grid = (pl.cdiv(n, nb),)          # partial last block: OOB stores are masked
    vmem_limit = int(min(vmem_bytes * 3 // 4, max(2 * nb * per_b, 32 << 20)))

    if use_2d:
        kernel = functools.partial(_contrast_kernel_2d, width=w, channels=c, plane=l)
        in_spec = pl.BlockSpec((nb, c * l), lambda i: (i, 0))
    else:
        kernel = functools.partial(_contrast_kernel_3d, width=w, channels=c)
        in_spec = pl.BlockSpec((nb, c, l), lambda i: (i, 0, 0))
    # TODO(synk): on v7x, if profiling shows exposed DMA at these block sizes,
    # add pipeline_mode=pl.Buffered(3) to the input spec.

    plane = pl.pallas_call(
        kernel,
        out_shape=jax.ShapeDtypeStruct((n, l), x.dtype),
        grid_spec=pltpu.PrefetchScalarGridSpec(
            num_scalar_prefetch=0,
            grid=grid,
            in_specs=[in_spec],
            out_specs=pl.BlockSpec((nb, l), lambda i: (i, 0)),
        ),
        compiler_params=pltpu.CompilerParams(
            dimension_semantics=("parallel",),
            vmem_limit_bytes=vmem_limit,
        ),
    )(x_in)

    plane = plane.reshape(n, 1, h, w)
    if return_plane:
        return plane
    # Broadcast OUTSIDE the kernel; fuses into the downstream consumer when
    # used inside the same jit instead of paying OCx HBM store bandwidth here.
    return jnp.broadcast_to(plane, (n, out_channels, h, w))


def _reference(x, out_channels):
    """Pure-JAX reference matching the PyTorch module exactly."""
    n, c, h, w = x.shape
    x_pad = jnp.pad(x, ((0, 0), (0, 0), (0, 1), (0, 1)))
    w_x = jnp.tile(
        jnp.array([[[[-1.0, 1.0], [-2.0, 2.0]]]], dtype=x.dtype),
        (out_channels, c, 1, 1),
    )
    w_y = jnp.tile(
        jnp.array([[[[2.0, 1.0], [-2.0, -1.0]]]], dtype=x.dtype),
        (out_channels, c, 1, 1),
    )
    dn = lax.conv_dimension_numbers(x_pad.shape, w_x.shape, ("NCHW", "OIHW", "NCHW"))
    xx = lax.conv_general_dilated(x_pad, w_x, (1, 1), "VALID", dimension_numbers=dn)
    xy = lax.conv_general_dilated(x_pad, w_y, (1, 1), "VALID", dimension_numbers=dn)
    return jnp.sqrt(jnp.abs(xx) + jnp.abs(xy))


if __name__ == "__main__":
    key = jax.random.PRNGKey(0)
    N, C, H, W = 2, 4, 16, 16
    out_channels = 4
    x = jax.random.normal(key, (N, C, H, W), dtype=jnp.float32)

    fwd = jax.jit(contrast_forward, static_argnums=1)
    out = jax.block_until_ready(fwd(x, out_channels))

    ref = _reference(x, out_channels)
    assert out.shape == (N, out_channels, H, W)
    assert jnp.allclose(out, ref, atol=1e-4, rtol=1e-4), "mismatch vs reference"

    # Also exercise a shape that takes the (N, C, L) fallback path and a
    # partial last batch block (N not divisible by the chosen block).
    N2, C2, H2, W2 = 3, 3, 7, 9
    x2 = jax.random.normal(jax.random.PRNGKey(1), (N2, C2, H2, W2), jnp.float32)
    out2 = jax.block_until_ready(jax.jit(contrast_forward, static_argnums=1)(x2, 2))
    ref2 = _reference(x2, 2)
    assert jnp.allclose(out2, ref2, atol=1e-4, rtol=1e-4), "mismatch (fallback path)"

    print("KERNEL_OK")
</pallas_src>

<mosaic_0001>
module attributes {stable_mosaic.version = 11 : i64} {
  func.func @_contrast_kernel_2d(%arg0: i32, %arg1: memref<2x1024xf32, #tpu.memory_space<vmem>>, %arg2: memref<2x256xf32, #tpu.memory_space<vmem>>) attributes {dimension_semantics = [#tpu.dimension_semantics<parallel>], iteration_bounds = array<i64: 1>, scalar_prefetch = 0 : i64, scratch_operands = 0 : i64, tpu.core_type = #tpu.core_type<tc>, window_params = [{transform_indices = @transform_0, window_bounds = array<i64: 2, 1024>}, {transform_indices = @transform_1, window_bounds = array<i64: 2, 256>}]} {
    %c0 = arith.constant 0 : index
    %c0_0 = arith.constant 0 : index
    %0 = vector.load %arg1[%c0, %c0_0] : memref<2x1024xf32, #tpu.memory_space<vmem>>, vector<2x256xf32>
    %c0_1 = arith.constant 0 : index
    %c256 = arith.constant 256 : index
    %1 = vector.load %arg1[%c0_1, %c256] : memref<2x1024xf32, #tpu.memory_space<vmem>>, vector<2x256xf32>
    %2 = arith.addf %0, %1 : vector<2x256xf32>
    %c0_2 = arith.constant 0 : index
    %c512 = arith.constant 512 : index
    %3 = vector.load %arg1[%c0_2, %c512] : memref<2x1024xf32, #tpu.memory_space<vmem>>, vector<2x256xf32>
    %4 = arith.addf %2, %3 : vector<2x256xf32>
    %c0_3 = arith.constant 0 : index
    %c768 = arith.constant 768 : index
    %5 = vector.load %arg1[%c0_3, %c768] : memref<2x1024xf32, #tpu.memory_space<vmem>>, vector<2x256xf32>
    %6 = arith.addf %4, %5 : vector<2x256xf32>
    %7 = tpu.iota {dimensions = array<i32: 1>} : vector<1x256xi32>
    %c16_i32 = arith.constant 16 : i32
    %c0_i32 = arith.constant 0 : i32
    %8 = arith.cmpi eq, %c16_i32, %c0_i32 : i32
    %c1_i32 = arith.constant 1 : i32
    %9 = arith.select %8, %c1_i32, %c16_i32 : i32
    %10 = vector.broadcast %9 : i32 to vector<1x256xi32>
    %11 = arith.remsi %7, %10 : vector<1x256xi32>
    %c0_i32_4 = arith.constant 0 : i32
    %12 = vector.broadcast %c0_i32_4 : i32 to vector<1x256xi32>
    %13 = arith.cmpi ne, %11, %12 : vector<1x256xi32>
    %c0_i32_5 = arith.constant 0 : i32
    %14 = vector.broadcast %c0_i32_5 : i32 to vector<1x256xi32>
    %15 = arith.cmpi slt, %11, %14 : vector<1x256xi32>
    %c0_i32_6 = arith.constant 0 : i32
    %16 = arith.cmpi slt, %9, %c0_i32_6 : i32
    %17 = vector.broadcast %16 : i1 to vector<1x256xi1>
    %18 = vector.broadcast %17 : vector<1x256xi1> to vector<1x256xi1>
    %19 = arith.xori %15, %18 : vector<1x256xi1>
    %20 = arith.andi %19, %13 : vector<1x256xi1>
    %21 = vector.broadcast %9 : i32 to vector<1x256xi32>
    %22 = arith.addi %11, %21 : vector<1x256xi32>
    %23 = arith.select %20, %22, %11 : vector<1x256xi1>, vector<1x256xi32>
    %c15_i32 = arith.constant 15 : i32
    %24 = vector.broadcast %c15_i32 : i32 to vector<1x256xi32>
    %25 = arith.cmpi ne, %23, %24 : vector<1x256xi32>
    %26 = arith.extui %25 : vector<1x256xi1> to vector<1x256xi32>
    %27 = arith.sitofp %26 : vector<1x256xi32> to vector<1x256xf32>
    %c240_i32 = arith.constant 240 : i32
    %28 = vector.broadcast %c240_i32 : i32 to vector<1x256xi32>
    %29 = arith.cmpi slt, %7, %28 : vector<1x256xi32>
    %30 = arith.extui %29 : vector<1x256xi1> to vector<1x256xi32>
    %31 = arith.sitofp %30 : vector<1x256xi32> to vector<1x256xf32>
    %32 = arith.mulf %27, %31 : vector<1x256xf32>
    %c255_i32 = arith.constant 255 : i32
    %33 = tpu.dynamic_rotate %6 by %c255_i32 dim 1 : vector<2x256xf32>, i32 -> vector<2x256xf32>
    %34 = vector.broadcast %27 : vector<1x256xf32> to vector<2x256xf32>
    %35 = arith.mulf %33, %34 : vector<2x256xf32>
    %c240_i32_7 = arith.constant 240 : i32
    %36 = tpu.dynamic_rotate %6 by %c240_i32_7 dim 1 : vector<2x256xf32>, i32 -> vector<2x256xf32>
    %37 = vector.broadcast %31 : vector<1x256xf32> to vector<2x256xf32>
    %38 = arith.mulf %36, %37 : vector<2x256xf32>
    %c239_i32 = arith.constant 239 : i32
    %39 = tpu.dynamic_rotate %6 by %c239_i32 dim 1 : vector<2x256xf32>, i32 -> vector<2x256xf32>
    %40 = vector.broadcast %32 : vector<1x256xf32> to vector<2x256xf32>
    %41 = arith.mulf %39, %40 : vector<2x256xf32>
    %42 = arith.subf %35, %6 : vector<2x256xf32>
    %43 = arith.subf %41, %38 : vector<2x256xf32>
    %cst = arith.constant 2.000000e+00 : f32
    %44 = vector.broadcast %cst : f32 to vector<2x256xf32>
    %45 = arith.mulf %44, %43 : vector<2x256xf32>
    %46 = arith.addf %42, %45 : vector<2x256xf32>
    %47 = arith.subf %6, %38 : vector<2x256xf32>
    %cst_8 = arith.constant 2.000000e+00 : f32
    %48 = vector.broadcast %cst_8 : f32 to vector<2x256xf32>
    %49 = arith.mulf %48, %47 : vector<2x256xf32>
    %50 = arith.subf %35, %41 : vector<2x256xf32>
    %51 = arith.addf %49, %50 : vector<2x256xf32>
    %52 = math.absf %46 : vector<2x256xf32>
    %53 = math.absf %51 : vector<2x256xf32>
    %54 = arith.addf %52, %53 : vector<2x256xf32>
    %55 = math.sqrt %54 : vector<2x256xf32>
    %c0_9 = arith.constant 0 : index
    %c0_10 = arith.constant 0 : index
    %56 = vector.load %arg2[%c0_9, %c0_10] : memref<2x256xf32, #tpu.memory_space<vmem>>, vector<2x256xf32>
    tpu.vector_store %arg2[%c0_9, %c0_10], %55 {strides = array<i32>} : memref<2x256xf32, #tpu.memory_space<vmem>>, vector<2x256xf32>,
    return
  }
  func.func @transform_0(%arg0: i32) -> (i32, i32) {
    %c0_i32 = arith.constant 0 : i32
    %c0_i32_0 = arith.constant 0 : i32
    return %arg0, %c0_i32 : i32, i32
  }
  func.func @transform_1(%arg0: i32) -> (i32, i32) {
    %c0_i32 = arith.constant 0 : i32
    %c0_i32_0 = arith.constant 0 : i32
    return %arg0, %c0_i32 : i32, i32
  }
}

</mosaic_0001>

<llo_original>
// kernel: contrast_forward.1
$region0: #{contrast_forward.1}
  #allocation0 [shape = 'u32[]', space=smem, size = 0x4, offset = 0x4, fixed_abs, tag = 'smem constant byte address 0x4 - core index']
  #allocation1 [shape = 'u32[72,128]{1,0:T(1,128)}', space=vmem, size = 0x9000, scoped, tag = 'internal scratch']
  %s0 = inlined_call_operand.vmem [shape: f32[2,1024], index: 0, kind: input, shape index: {}]
  %s1 = inlined_call_operand.vmem [shape: f32[2,256], index: 1, kind: output, shape index: {}]
  %s2 = sld [smem:[#allocation0]]
  $region14: #{contrast_forward.1} parent=0
    _
  %s4 = ssub.s32 1, %s2
  %s5 = scalar_select 0, %s4, %s2
  // Predicated region
  $region2: #{contrast_forward.1} parent=0 // pred_check
    _
  $region3: #{contrast_forward.1} parent=0 // pred_check_branch
    %7 = sbr.rel (0) target = $region5
  $region4: #{contrast_forward.1} parent=0 // pred_region
    _
  $region5: #{contrast_forward.1} parent=0 // pred_fallthru
    _
  %v8 = vld [vmem:[%s0] sm:$0xf]
  %v9 = vld [vmem:[%s0 + $0x4] sm:$0xf]
  %v10 = vadd.f32 %v8, %v9
  %v11 = vld [vmem:[%s0 + $0x8] sm:$0xf]
  %v12 = vadd.f32 %v10, %v11
  %v13 = vld [vmem:[%s0 + $0xc] sm:$0xf]
  %v14 = vadd.f32 %v12, %v13
  %v15 = vlaneseq
  %v16 = vand.u32 %v15, 127
  %v17 = vadd.s32 %v16, 128
  %vm18 = vcmp.lt.s32.totalorder %v16, 0
  %v19 = vsub.s32 0, %v16
  %v20 = vsel %vm18, %v19, %v16
  %v21 = vshrl.u32 %v20, 4
  %v22 = vand.u32 %v20, 15
  %v23 = vsub.s32 0, %v22
  %v24 = vsel %vm18, %v23, %v22
  %vm25 = vcmp.lt.s32.totalorder %v17, 0
  %v26 = vsub.s32 0, %v17
  %v27 = vsel %vm25, %v26, %v17
  %v28 = vshrl.u32 %v27, 4
  %v29 = vand.u32 %v27, 15
  %v30 = vsub.s32 0, %v29
  %v31 = vsel %vm25, %v30, %v29
  %vm32 = vcmp.ne.s32.totalorder %v24, 0
  %vm33 = vcmp.ne.s32.totalorder %v31, 0
  %vm34 = vcmp.lt.s32.totalorder %v24, 0
  %vm35 = vcmp.lt.s32.totalorder %v31, 0
  %vm36 = vmand %vm34, %vm32
  %vm37 = vmand %vm35, %vm33
  %v38 = vadd.s32 %v24, 16
  %v39 = vadd.s32 %v31, 16
  %v40 = vsel %vm36, %v38, %v24
  %v41 = vsel %vm37, %v39, %v31
  %vm42 = vcmp.ne.s32.totalorder %v40, 15
  %vm43 = vcmp.ne.s32.totalorder %v41, 15
  %v44 = vsel %vm42, 1, 0
  %v45 = vsel %vm43, 1, 0
  %v46 = vcvt.s32.f32 %v44
  %v47 = vcvt.s32.f32 %v45
  %vm48 = vcmp.lt.s32.totalorder %v16, 240
  %vm49 = vcmp.lt.s32.totalorder %v17, 240
  %v50 = vsel %vm48, 1, 0
  %v51 = vsel %vm49, 1, 0
  %v52 = vcvt.s32.f32 %v50
  %v53 = vcvt.s32.f32 %v51
  %v54 = vmul.f32 %v46, %v52
  %v55 = vmul.f32 %v47, %v53
  %57 = vst [vmem:[#allocation1] ss:$4 sm:$0xff] %v14
  %v58 = vld.sshfl [vmem:[#allocation1] sm:$0xff pattern:$0x73625140]
  %v59 = vld.sshfl [vmem:[#allocation1 + $0x8] sm:$0xff pattern:$0x73625140]
  %62 = vrot.lane.b32.xlu0 %v58, 127
  %v63 = vpop.permute.xlu0 %62
  %64 = vrot.lane.b32.xlu0 %v59, 127
  %v65 = vpop.permute.xlu0 %64
  %vm66 = vcmp.lt.s32.totalorder %v16, 127
  %v67 = vsel %vm66, %v63, %v65
  %v68 = vsel %vm66, %v65, %v63
  %v69 = vmul.f32 %v67, %v46
  %v70 = vmul.f32 %v68, %v47
  %71 = vst [vmem:[#allocation1] ss:$4 sm:$0xff] %v14
  %v72 = vld.sshfl [vmem:[#allocation1] sm:$0xff pattern:$0x73625140]
  %v73 = vld.sshfl [vmem:[#allocation1 + $0x8] sm:$0xff pattern:$0x73625140]
  %76 = vrot.lane.b32.xlu0 %v72, 112
  %v77 = vpop.permute.xlu0 %76
  %78 = vrot.lane.b32.xlu0 %v73, 112
  %v79 = vpop.permute.xlu0 %78
  %vm80 = vcmp.lt.s32.totalorder %v16, 112
  %v81 = vsel %vm80, %v77, %v79
  %v82 = vsel %vm80, %v79, %v77
  %v83 = vmul.f32 %v81, %v52
  %v84 = vmul.f32 %v82, %v53
  %85 = vst [vmem:[#allocation1] ss:$4 sm:$0xff] %v14
  %v86 = vld.sshfl [vmem:[#allocation1] sm:$0xff pattern:$0x73625140]
  %v87 = vld.sshfl [vmem:[#allocation1 + $0x8] sm:$0xff pattern:$0x73625140]
  %90 = vrot.lane.b32.xlu0 %v86, 111
  %v91 = vpop.permute.xlu0 %90
  %92 = vrot.lane.b32.xlu0 %v87, 111
  %v93 = vpop.permute.xlu0 %92
  %vm94 = vcmp.lt.s32.totalorder %v16, 111
  %v95 = vsel %vm94, %v91, %v93
  %v96 = vsel %vm94, %v93, %v91
  %v97 = vmul.f32 %v95, %v54
  %v98 = vmul.f32 %v96, %v55
  %99 = vst [vmem:[#allocation1] ss:$4 sm:$0xff] %v14
  %v100 = vld.sshfl [vmem:[#allocation1] sm:$0xff pattern:$0x73625140]
  %v101 = vld.sshfl [vmem:[#allocation1 + $0x8] sm:$0xff pattern:$0x73625140]
  %v104 = vsub.f32 %v69, %v100
  %v105 = vsub.f32 %v70, %v101
  %v106 = vsub.f32 %v97, %v83
  %v107 = vsub.f32 %v98, %v84
  %v108 = vmul.f32 %v106, 2.0
  %v109 = vmul.f32 %v107, 2.0
  %v110 = vadd.f32 %v104, %v108
  %v111 = vadd.f32 %v105, %v109
  %v114 = vrot.slane %v84, 6
  %vm115 = vcmask 1041408
  %v116 = vsel %vm115, %v83, %v114
  %v118 = vsub.f32 %v14, %v116
  %v119 = vmul.f32 %v118, 2.0
  %v120 = vsub.f32 %v69, %v97
  %v121 = vsub.f32 %v70, %v98
  %v124 = vrot.slane %v121, 6
  %v125 = vsel %vm115, %v120, %v124
  %v127 = vadd.f32 %v119, %v125
  %v128 = vand.u32 2147483647, %v110
  %v129 = vand.u32 2147483647, %v111
  %v130 = vand.u32 2147483647, %v127
  %132 = vst [vmem:[#allocation1] ss:$4 sm:$0xff] %v130
  %v133 = vld.sshfl [vmem:[#allocation1] sm:$0xff pattern:$0x73625140]
  %v134 = vld.sshfl [vmem:[#allocation1 + $0x8] sm:$0xff pattern:$0x73625140]
  %v137 = vadd.f32 %v128, %v133
  %v138 = vadd.f32 %v129, %v134
  %v139 = vrsqrt.pop %v137
  %v140 = vmul.f32 %v139, %v137
  %v141 = vmul.f32 %v140, %v139
  %v142 = vmul.f32 0.5, %v141
  %v143 = vsub.f32 1.5, %v142
  %v144 = vmul.f32 %v139, %v143
  %v145 = vmul.f32 %v137, %v144
  %vm146 = vcmp.eq.f32.partialorder %v137, inf
  %v147 = vsel %vm146, %v137, %v145
  %vm148 = vcmp.eq.f32.partialorder %v137, 0.0
  %v149 = vand.u32 %v137, 2147483648
  %v150 = vsel %vm148, %v149, %v147
  %v151 = vrsqrt.pop %v138
  %v152 = vmul.f32 %v151, %v138
  %v153 = vmul.f32 %v152, %v151
  %v154 = vmul.f32 0.5, %v153
  %v155 = vsub.f32 1.5, %v154
  %v156 = vmul.f32 %v151, %v155
  %v157 = vmul.f32 %v138, %v156
  %vm158 = vcmp.eq.f32.partialorder %v138, inf
  %v159 = vsel %vm158, %v138, %v157
  %vm160 = vcmp.eq.f32.partialorder %v138, 0.0
  %v161 = vand.u32 %v138, 2147483648
  %v162 = vsel %vm160, %v161, %v159
  %v165 = vrot.slane %v162, 6
  %v166 = vsel %vm115, %v150, %v165
  %168 = vst [vmem:[%s1] sm:$0xf] %v166
  // Predicated region
  $region6: #{contrast_forward.1} parent=0 // pred_check
    _
  $region7: #{contrast_forward.1} parent=0 // pred_check_branch
    %170 = sbr.rel (0) target = $region9
  $region8: #{contrast_forward.1} parent=0 // pred_region
    _
  $region9: #{contrast_forward.1} parent=0 // pred_fallthru
    _
  // Predicated region
  $region10: #{contrast_forward.1} parent=0 // pred_check
    _
  $region11: #{contrast_forward.1} parent=0 // pred_check_branch
    %172 = sbr.rel (0) target = $region13
  $region12: #{contrast_forward.1} parent=0 // pred_region
    _
  $region13: #{contrast_forward.1} parent=0 // pred_fallthru
    _

</llo_original>
